<compile_context>
chip_gen: v7x
topology: tpu7x:2x2x1
jax: 0.10.0
libtpu: 0.0.40
codegen_flags: <defaults>
</compile_context>

<pallas_src>
import functools

import jax
import jax.numpy as jnp
from jax.experimental import pallas as pl
from jax.experimental.pallas import tpu as pltpu

MAX_LEN = 256  # positional-table size, mirrors the PyTorch module


def _round_up(x: int, m: int) -> int:
    return ((x + m - 1) // m) * m


def _sublane(dtype) -> int:
    # Minimum second-to-minor tile: 8 for 4-byte, 16 for 2-byte, 32 for 1-byte.
    return max(8, 32 // jnp.dtype(dtype).itemsize)


def _vmem_capacity_bytes() -> int:
    try:
        return int(pltpu.get_tpu_info().vmem_capacity_bytes)
    except Exception:
        return 64 * 1024 * 1024  # conservative default (v7x per-TensorCore)


# ---------------------------------------------------------------------------
# Path 1: VMEM-resident table, vocab-chunked one-hot gather on the MXU.
# ---------------------------------------------------------------------------
def _onehot_encoder_kernel(ids_ref, emb_ref, pos_ref, out_ref, *, vchunk):
    # ids_ref: (TILE_N, 1) int32 | emb_ref: (V_pad, d) resident table
    # pos_ref: (TILE_N, d)       | out_ref: (TILE_N, 2d)
    tile_n = ids_ref.shape[0]
    v_pad, d = emb_ref.shape
    nchunks = v_pad // vchunk

    ids = ids_ref[...]  # (TILE_N, 1)

    def body(c, acc):
        off = pl.multiple_of(c * vchunk, vchunk)
        emb_chunk = emb_ref[pl.ds(off, vchunk), :]                      # (VCHUNK, d)
        col = jax.lax.broadcasted_iota(jnp.int32, (tile_n, vchunk), 1) + off
        one_hot = (ids == col).astype(emb_chunk.dtype)                  # (TILE_N, VCHUNK)
        return acc + jnp.dot(one_hot, emb_chunk,
                             preferred_element_type=jnp.float32)

    femb = jax.lax.fori_loop(0, nchunks, body,
                             jnp.zeros((tile_n, d), jnp.float32),
                             unroll=True)

    out_ref[:, :d] = femb.astype(out_ref.dtype)
    out_ref[:, d:] = pos_ref[...]


# ---------------------------------------------------------------------------
# Path 2: table stays in HBM; batched per-row DMA gather (large vocab).
# ---------------------------------------------------------------------------
def _dma_gather_encoder_kernel(ids_smem, pos_ref, emb_hbm, out_ref, buf, sems,
                               *, tile_n, d):
    base = pl.program_id(0) * tile_n

    def row_copy(i):
        row = ids_smem[base + i]
        return pltpu.make_async_copy(emb_hbm.at[pl.ds(row, 1)],
                                     buf.at[pl.ds(i, 1)],
                                     sems.at[i])

    @pl.loop(0, tile_n)
    def _start(i):
        row_copy(i).start()

    @pl.loop(0, tile_n)
    def _wait(i):
        row_copy(i).wait()

    out_ref[:, :d] = buf[...].astype(out_ref.dtype)
    out_ref[:, d:] = pos_ref[...]


# ---------------------------------------------------------------------------
# Wrapper
# ---------------------------------------------------------------------------
def encoder_forward(fnums, emb_table, pos_table, *, force_dma_gather=False):
    """fnums: (n,) int ids; emb_table: (V, d); pos_table: (MAX_LEN, d).

    Returns (n, 2d) == concat([emb_table[fnums], pos_table[:n]], -1).
    """
    n = int(fnums.shape[0])
    vocab, d = emb_table.shape
    assert pos_table.shape[-1] == d
    assert emb_table.dtype == pos_table.dtype, "tables must share a dtype"
    assert 1 <= n <= pos_table.shape[0]

    dtype = emb_table.dtype
    itemsize = jnp.dtype(dtype).itemsize
    sub = _sublane(dtype)

    # ----- path selection (generation-aware VMEM budget, worst-case tile) ----
    vmem_cap = _vmem_capacity_bytes()
    vchunk = min(512, _round_up(vocab, 128))
    v_pad = _round_up(vocab, vchunk)
    est_tile = 256
    table_bytes = v_pad * d * itemsize                         # single-buffered
    io_bytes = 2 * est_tile * (4 + 3 * d * itemsize)           # dbl-buffered ids/pos/out
    transient_bytes = est_tile * (vchunk * (8 + 1 + itemsize) + 4 * d)
    resident_need = table_bytes + io_bytes + transient_bytes
    use_resident = (not force_dma_gather) and resident_need <= int(0.75 * vmem_cap)

    # ----- row tiling ---------------------------------------------------------
    max_tile = 256 if use_resident else 64     # cap outstanding row DMAs on path 2
    n_sub = _round_up(n, sub)
    if n_sub < 128 and n_sub <= max_tile:
        tile_n = n_sub                                             # single tile
    elif n_sub <= 2 * max_tile:
        tile_n = min(max_tile, _round_up((n_sub + 1) // 2, sub))   # 2 tiles (v7x megacore)
    else:
        tile_n = max_tile
    num_tiles = pl.cdiv(n, tile_n)
    n_pad = num_tiles * tile_n

    # ids: clamp out-of-range (PyTorch nn.Embedding would raise) and pad the
    # tail tile; padded rows gather row 0 and are sliced off below.
    ids = jnp.clip(fnums.astype(jnp.int32), 0, vocab - 1)
    if n_pad > n:
        ids = jnp.pad(ids, (0, n_pad - n))

    # Positional rows covering [0, n_pad).
    if n_pad <= pos_table.shape[0]:
        pos = pos_table[:n_pad]
    else:  # rows >= len(pos_table) are padding only; sliced off below
        pos = jnp.pad(pos_table, ((0, n_pad - pos_table.shape[0]), (0, 0)))

    out_shape = jax.ShapeDtypeStruct((n_pad, 2 * d), dtype)

    if use_resident:
        emb = emb_table
        if v_pad > vocab:
            emb = jnp.pad(emb, ((0, v_pad - vocab), (0, 0)))
        ids2d = ids.reshape(n_pad, 1)
        kernel = functools.partial(_onehot_encoder_kernel, vchunk=vchunk)
        # Generous limit: also covers a double-buffered table in case
        # pipeline_mode=Buffered(1) is unavailable on this jax version.
        vmem_limit = int(min(int(0.9 * vmem_cap),
                             2 * table_bytes + io_bytes + transient_bytes + (8 << 20)))

        def run(single_buffer_table: bool):
            table_kwargs = (dict(pipeline_mode=pl.Buffered(1))
                            if single_buffer_table else {})
            grid_spec = pltpu.PrefetchScalarGridSpec(
                num_scalar_prefetch=0,
                grid=(num_tiles,),
                in_specs=[
                    pl.BlockSpec((tile_n, 1), lambda t: (t, 0)),           # ids
                    pl.BlockSpec((v_pad, d), lambda t: (0, 0),             # resident table
                                 **table_kwargs),
                    pl.BlockSpec((tile_n, d), lambda t: (t, 0)),           # pos rows
                ],
                out_specs=pl.BlockSpec((tile_n, 2 * d), lambda t: (t, 0)),
            )
            return pl.pallas_call(
                kernel,
                out_shape=out_shape,
                grid_spec=grid_spec,
                compiler_params=pltpu.CompilerParams(
                    dimension_semantics=("parallel",),
                    vmem_limit_bytes=vmem_limit,
                ),
            )(ids2d, emb, pos)

        try:
            out = run(True)       # single-buffer the resident table
        except Exception:
            out = run(False)      # fall back to default pipelining
    else:
        kernel = functools.partial(_dma_gather_encoder_kernel, tile_n=tile_n, d=d)
        grid_spec = pltpu.PrefetchScalarGridSpec(
            num_scalar_prefetch=1,                    # ids -> SMEM
            grid=(num_tiles,),
            in_specs=[
                pl.BlockSpec((tile_n, d), lambda t, ids_s: (t, 0)),        # pos rows
                pl.BlockSpec(memory_space=pl.ANY),                          # table in HBM
            ],
            out_specs=pl.BlockSpec((tile_n, 2 * d), lambda t, ids_s: (t, 0)),
            scratch_shapes=[
                pltpu.VMEM((tile_n, d), dtype),
                pltpu.SemaphoreType.DMA((tile_n,)),
            ],
        )
        out = pl.pallas_call(
            kernel,
            out_shape=out_shape,
            grid_spec=grid_spec,
            compiler_params=pltpu.CompilerParams(
                dimension_semantics=("parallel",),
                vmem_limit_bytes=int(min(int(0.9 * vmem_cap), 32 << 20)),
            ),
        )(ids, pos, emb_table)

    # No extra HBM round-trip when n is already tile-aligned.
    return out if n_pad == n else out[:n]


if __name__ == "__main__":
    key = jax.random.PRNGKey(0)
    k_emb, k_pos, k_ids, k_emb2, k_ids2 = jax.random.split(key, 5)

    # --- primary path: small vocab, VMEM-resident one-hot MXU gather --------
    vocab_size, dims, n = 64, 128, 8
    emb_table = jax.random.normal(k_emb, (vocab_size, dims), dtype=jnp.float32)
    pos_table = jax.random.normal(k_pos, (MAX_LEN, dims), dtype=jnp.float32)
    fnums = jax.random.randint(k_ids, (n,), 0, vocab_size, dtype=jnp.int32)

    out = jax.block_until_ready(encoder_forward(fnums, emb_table, pos_table))
    ref = jnp.concatenate([emb_table[fnums], pos_table[jnp.arange(n)]], axis=-1)
    assert out.shape == (n, 2 * dims), out.shape
    assert jnp.allclose(out, ref), "resident-path mismatch vs reference"

    # --- fallback path: HBM DMA row gather (forced here at small size) ------
    vocab2, n2 = 512, 40
    emb_table2 = jax.random.normal(k_emb2, (vocab2, dims), dtype=jnp.float32)
    fnums2 = jax.random.randint(k_ids2, (n2,), 0, vocab2, dtype=jnp.int32)
    out2 = jax.block_until_ready(
        encoder_forward(fnums2, emb_table2, pos_table, force_dma_gather=True))
    ref2 = jnp.concatenate([emb_table2[fnums2], pos_table[jnp.arange(n2)]], axis=-1)
    assert out2.shape == (n2, 2 * dims), out2.shape
    assert jnp.allclose(out2, ref2), "DMA-gather-path mismatch vs reference"

    print("KERNEL_OK")
</pallas_src>

<mosaic_0001>
module attributes {stable_mosaic.version = 11 : i64} {
  func.func @_onehot_encoder_kernel(%arg0: i32, %arg1: memref<8x1xi32, #tpu.memory_space<vmem>>, %arg2: memref<128x128xf32, #tpu.memory_space<vmem>>, %arg3: memref<8x128xf32, #tpu.memory_space<vmem>>, %arg4: memref<8x256xf32, #tpu.memory_space<vmem>>) attributes {dimension_semantics = [#tpu.dimension_semantics<parallel>], iteration_bounds = array<i64: 1>, scalar_prefetch = 0 : i64, scratch_operands = 0 : i64, tpu.core_type = #tpu.core_type<tc>, window_params = [{transform_indices = @transform_0, window_bounds = array<i64: 8, 1>}, {pipeline_mode = #tpu.pipeline_mode<synchronous>, transform_indices = @transform_1, window_bounds = array<i64: 128, 128>}, {transform_indices = @transform_2, window_bounds = array<i64: 8, 128>}, {transform_indices = @transform_3, window_bounds = array<i64: 8, 256>}]} {
    %c0 = arith.constant 0 : index
    %c0_0 = arith.constant 0 : index
    %0 = vector.load %arg1[%c0, %c0_0] : memref<8x1xi32, #tpu.memory_space<vmem>>, vector<8x1xi32>
    %cst = arith.constant 0.000000e+00 : f32
    %1 = vector.broadcast %cst : f32 to vector<8x128xf32>
    %c0_i32 = arith.constant 0 : i32
    %c128_i32 = arith.constant 128 : i32
    %2 = arith.muli %c0_i32, %c128_i32 : i32
    %3 = tpu.assume_multiple %2, 128 : i32
    %4 = arith.index_cast %3 : i32 to index
    %c0_1 = arith.constant 0 : index
    %5 = vector.load %arg2[%4, %c0_1] : memref<128x128xf32, #tpu.memory_space<vmem>>, vector<128x128xf32>
    %6 = tpu.iota {dimensions = array<i32: 1>} : vector<8x128xi32>
    %7 = vector.broadcast %3 : i32 to vector<8x128xi32>
    %8 = arith.addi %6, %7 : vector<8x128xi32>
    %9 = vector.broadcast %0 : vector<8x1xi32> to vector<8x128xi32>
    %10 = arith.cmpi eq, %9, %8 : vector<8x128xi32>
    %11 = arith.extui %10 : vector<8x128xi1> to vector<8x128xi32>
    %12 = arith.sitofp %11 : vector<8x128xi32> to vector<8x128xf32>
    %cst_2 = arith.constant dense<0.000000e+00> : vector<8x128xf32>
    %13 = tpu.matmul %12, %5, %cst_2 {dimension_numbers = #tpu.dot_dimension_numbers<[1], [0], [0], [1], [0, 0, 1, 1], [], []>} : vector<8x128xf32>, vector<128x128xf32>, vector<8x128xf32> -> vector<8x128xf32>
    %14 = arith.addf %1, %13 : vector<8x128xf32>
    %c1_i32 = arith.constant 1 : i32
    %c0_3 = arith.constant 0 : index
    %c0_4 = arith.constant 0 : index
    %15 = vector.load %arg4[%c0_3, %c0_4] : memref<8x256xf32, #tpu.memory_space<vmem>>, vector<8x128xf32>
    tpu.vector_store %arg4[%c0_3, %c0_4], %14 {strides = array<i32>} : memref<8x256xf32, #tpu.memory_space<vmem>>, vector<8x128xf32>,
    %c0_5 = arith.constant 0 : index
    %c0_6 = arith.constant 0 : index
    %16 = vector.load %arg3[%c0_5, %c0_6] : memref<8x128xf32, #tpu.memory_space<vmem>>, vector<8x128xf32>
    %c0_7 = arith.constant 0 : index
    %c128 = arith.constant 128 : index
    %17 = vector.load %arg4[%c0_7, %c128] : memref<8x256xf32, #tpu.memory_space<vmem>>, vector<8x128xf32>
    tpu.vector_store %arg4[%c0_7, %c128], %16 {strides = array<i32>} : memref<8x256xf32, #tpu.memory_space<vmem>>, vector<8x128xf32>,
    return
  }
  func.func @transform_0(%arg0: i32) -> (i32, i32) {
    %c0_i32 = arith.constant 0 : i32
    %c0_i32_0 = arith.constant 0 : i32
    return %arg0, %c0_i32 : i32, i32
  }
  func.func @transform_1(%arg0: i32) -> (i32, i32) {
    %c0_i32 = arith.constant 0 : i32
    %c0_i32_0 = arith.constant 0 : i32
    %c0_i32_1 = arith.constant 0 : i32
    return %c0_i32, %c0_i32_0 : i32, i32
  }
  func.func @transform_2(%arg0: i32) -> (i32, i32) {
    %c0_i32 = arith.constant 0 : i32
    %c0_i32_0 = arith.constant 0 : i32
    return %arg0, %c0_i32 : i32, i32
  }
  func.func @transform_3(%arg0: i32) -> (i32, i32) {
    %c0_i32 = arith.constant 0 : i32
    %c0_i32_0 = arith.constant 0 : i32
    return %arg0, %c0_i32 : i32, i32
  }
}

module attributes {stable_mosaic.version = 11 : i64} {
  func.func @_onehot_encoder_kernel(%arg0: i32, %arg1: memref<8x1xi32, #tpu.memory_space<vmem>>, %arg2: memref<128x128xf32, #tpu.memory_space<vmem>>, %arg3: memref<8x128xf32, #tpu.memory_space<vmem>>, %arg4: memref<8x256xf32, #tpu.memory_space<vmem>>) attributes {dimension_semantics = [#tpu.dimension_semantics<parallel>], iteration_bounds = array<i64: 1>, scalar_prefetch = 0 : i64, scratch_operands = 0 : i64, tpu.core_type = #tpu.core_type<tc>, window_params = [{transform_indices = @transform_0, window_bounds = array<i64: 8, 1>}, {pipeline_mode = #tpu.pipeline_mode<synchronous>, transform_indices = @transform_1, window_bounds = array<i64: 128, 128>}, {transform_indices = @transform_2, window_bounds = array<i64: 8, 128>}, {transform_indices = @transform_3, window_bounds = array<i64: 8, 256>}]} {
    %c0 = arith.constant 0 : index
    %c0_0 = arith.constant 0 : index
    %0 = vector.load %arg1[%c0, %c0_0] : memref<8x1xi32, #tpu.memory_space<vmem>>, vector<8x1xi32>
    %cst = arith.constant 0.000000e+00 : f32
    %1 = vector.broadcast %cst : f32 to vector<8x128xf32>
    %c0_i32 = arith.constant 0 : i32
    %c128_i32 = arith.constant 128 : i32
    %2 = arith.muli %c0_i32, %c128_i32 : i32
    %3 = tpu.assume_multiple %2, 128 : i32
    %4 = arith.index_cast %3 : i32 to index
    %c0_1 = arith.constant 0 : index
    %5 = vector.load %arg2[%4, %c0_1] : memref<128x128xf32, #tpu.memory_space<vmem>>, vector<128x128xf32>
    %6 = tpu.iota {dimensions = array<i32: 1>} : vector<8x128xi32>
    %7 = vector.broadcast %3 : i32 to vector<8x128xi32>
    %8 = arith.addi %6, %7 : vector<8x128xi32>
    %9 = vector.broadcast %0 : vector<8x1xi32> to vector<8x128xi32>
    %10 = arith.cmpi eq, %9, %8 : vector<8x128xi32>
    %11 = arith.extui %10 : vector<8x128xi1> to vector<8x128xi32>
    %12 = arith.sitofp %11 : vector<8x128xi32> to vector<8x128xf32>
    %cst_2 = arith.constant dense<0.000000e+00> : vector<8x128xf32>
    %13 = tpu.matmul %12, %5, %cst_2 {dimension_numbers = #tpu.dot_dimension_numbers<[1], [0], [0], [1], [0, 0, 1, 1], [], []>} : vector<8x128xf32>, vector<128x128xf32>, vector<8x128xf32> -> vector<8x128xf32>
    %14 = arith.addf %1, %13 : vector<8x128xf32>
    %c1_i32 = arith.constant 1 : i32
    %c0_3 = arith.constant 0 : index
    %c0_4 = arith.constant 0 : index
    %15 = vector.load %arg4[%c0_3, %c0_4] : memref<8x256xf32, #tpu.memory_space<vmem>>, vector<8x128xf32>
    tpu.vector_store %arg4[%c0_3, %c0_4], %14 {strides = array<i32>} : memref<8x256xf32, #tpu.memory_space<vmem>>, vector<8x128xf32>,
    %c0_5 = arith.constant 0 : index
    %c0_6 = arith.constant 0 : index
    %16 = vector.load %arg3[%c0_5, %c0_6] : memref<8x128xf32, #tpu.memory_space<vmem>>, vector<8x128xf32>
    %c0_7 = arith.constant 0 : index
    %c128 = arith.constant 128 : index
    %17 = vector.load %arg4[%c0_7, %c128] : memref<8x256xf32, #tpu.memory_space<vmem>>, vector<8x128xf32>
    tpu.vector_store %arg4[%c0_7, %c128], %16 {strides = array<i32>} : memref<8x256xf32, #tpu.memory_space<vmem>>, vector<8x128xf32>,
    return
  }
  func.func @transform_0(%arg0: i32) -> (i32, i32) {
    %c0_i32 = arith.constant 0 : i32
    %c0_i32_0 = arith.constant 0 : i32
    return %arg0, %c0_i32 : i32, i32
  }
  func.func @transform_1(%arg0: i32) -> (i32, i32) {
    %c0_i32 = arith.constant 0 : i32
    %c0_i32_0 = arith.constant 0 : i32
    %c0_i32_1 = arith.constant 0 : i32
    return %c0_i32, %c0_i32_0 : i32, i32
  }
  func.func @transform_2(%arg0: i32) -> (i32, i32) {
    %c0_i32 = arith.constant 0 : i32
    %c0_i32_0 = arith.constant 0 : i32
    return %arg0, %c0_i32 : i32, i32
  }
  func.func @transform_3(%arg0: i32) -> (i32, i32) {
    %c0_i32 = arith.constant 0 : i32
    %c0_i32_0 = arith.constant 0 : i32
    return %arg0, %c0_i32 : i32, i32
  }
}

</mosaic_0001>

<llo_original>
// kernel: tpu_custom_call.1
$region0: #{tpu_custom_call.1}
  #allocation0 [shape = 'u32[]', space=smem, size = 0x4, offset = 0x4, fixed_abs, tag = 'smem constant byte address 0x4 - core index']
  #allocation1 [shape = 'u32[144,128]{1,0:T(1,128)}', space=vmem, size = 0x12000, scoped, tag = 'internal scratch']
  %s0 = inlined_call_operand.vmem [shape: s32[8,1], index: 0, kind: input, shape index: {}]
  %s1 = inlined_call_operand.hbm [shape: f32[128,128], index: 1, kind: input, shape index: {}]
  %s2 = inlined_call_operand.vmem [shape: f32[8,128], index: 2, kind: input, shape index: {}]
  %s3 = inlined_call_operand.hbm [shape: f32[8,256], index: 3, kind: output, shape index: {}]
  %s4 = sld [smem:[#allocation0]]
  $region26: #{tpu_custom_call.1} parent=0
    _
  %s6 = ssub.s32 1, %s4
  %s7 = scalar_select 0, %s6, %s4
  $region1: #{tpu_custom_call.1} parent=0
    #allocation2 [shape = 'u8[65536]{0}', space=vmem, size = 0x10000, scoped, tag = 'input window, operand 1, single buffered']
    #allocation3 [shape = 's32[1]{0}', space=sflag, size = 0x4, scoped, tag = 'scoped memory for tpu_custom_call.1']
    #allocation4 [shape = 's32[1]{0}', space=sflag, size = 0x4, scoped, tag = 'scoped memory for tpu_custom_call.1']
    #allocation5 [shape = 'u8[8192]{0}', space=vmem, size = 0x2000, scoped, tag = 'output window, operand 0, single buffered']
    %8 = vsyncpa [#allocation3], 0
    %9 = vsyncpa [#allocation4], 0
    // Predicated region
    $region2: #{tpu_custom_call.1} parent=1 // pred_check
      _
    $region3: #{tpu_custom_call.1} parent=1 // pred_check_branch
      %11 = sbr.rel (0) target = $region5
    $region4: #{tpu_custom_call.1} parent=1 // pred_region
      _
    $region5: #{tpu_custom_call.1} parent=1 // pred_fallthru
      _
    // Predicated region
    $region6: #{tpu_custom_call.1} parent=1 // pred_check
      _
    $region7: #{tpu_custom_call.1} parent=1 // pred_check_branch
      %13 = sbr.rel (0) target = $region9
    $region8: #{tpu_custom_call.1} parent=1 // pred_region
      %s15 = ssub.s32 2048, 2048
      %16 = vsyncadd [#allocation3], %s15
      %s17 = sshll.u32 [#allocation2], 4
      %s18 = int_to_ptr.vmem [resolvable:$true] %s17
      %23 = dma.hbm_to_vmem [thread:$0]  %s1, 2048, %s18, [#allocation3], 128, 128, 8
    $region9: #{tpu_custom_call.1} parent=1 // pred_fallthru
      _
    // Predicated region
    $region10: #{tpu_custom_call.1} parent=1 // pred_check
      _
    $region11: #{tpu_custom_call.1} parent=1 // pred_check_branch
      %25 = sbr.rel (0) target = $region13
    $region12: #{tpu_custom_call.1} parent=1 // pred_region
      _
    $region13: #{tpu_custom_call.1} parent=1 // pred_fallthru
      _
    // Predicated region
    $region14: #{tpu_custom_call.1} parent=1 // pred_check
      _
    $region15: #{tpu_custom_call.1} parent=1 // pred_check_branch
      %27 = sbr.rel (0) target = $region17
    $region16: #{tpu_custom_call.1} parent=1 // pred_region
      %28 = dma.done [#allocation3], 2048
    $region17: #{tpu_custom_call.1} parent=1 // pred_fallthru
      _
    %v29 = vld [vmem:[%s0] sm:$0xff]
    %v30 = vld [vmem:[#allocation2] sm:$0xff]
    %v31 = vld [vmem:[#allocation2 + $0x8] sm:$0xff]
    %v32 = vld [vmem:[#allocation2 + $0x10] sm:$0xff]
    %v33 = vld [vmem:[#allocation2 + $0x18] sm:$0xff]
    %v34 = vld [vmem:[#allocation2 + $0x20] sm:$0xff]
    %v35 = vld [vmem:[#allocation2 + $0x28] sm:$0xff]
    %v36 = vld [vmem:[#allocation2 + $0x30] sm:$0xff]
    %v37 = vld [vmem:[#allocation2 + $0x38] sm:$0xff]
    %v38 = vld [vmem:[#allocation2 + $0x40] sm:$0xff]
    %v39 = vld [vmem:[#allocation2 + $0x48] sm:$0xff]
    %v40 = vld [vmem:[#allocation2 + $0x50] sm:$0xff]
    %v41 = vld [vmem:[#allocation2 + $0x58] sm:$0xff]
    %v42 = vld [vmem:[#allocation2 + $0x60] sm:$0xff]
    %v43 = vld [vmem:[#allocation2 + $0x68] sm:$0xff]
    %v44 = vld [vmem:[#allocation2 + $0x70] sm:$0xff]
    %v45 = vld [vmem:[#allocation2 + $0x78] sm:$0xff]
    %v46 = vlaneseq
    %v47 = vand.u32 %v46, 127
    %v48 = vstv 0
    %v49 = vadd.s32 %v47, %v48
    %50 = vset.pattern.permute.xlu0 0
    %51 = vperm.xlu0 %50, %v29
    %v52 = vpop.permute.xlu0 %51
    %vm53 = vcmp.eq.s32.totalorder %v52, %v49
    %v54 = vsel %vm53, 1, 0
    %v55 = vcvt.s32.f32 %v54
    %56 = vmatprep.subr.mxu0 0.0
    %57 = vmatpush1.msra.mxu0 %v30
    %58 = vmatprep.subr.mxu0 0.0
    %59 = vmatpush1.msra.mxu0 %v31
    %60 = vmatprep.subr.mxu0 0.0
    %61 = vmatpush1.msra.mxu0 %v32
    %62 = vmatprep.subr.mxu0 0.0
    %63 = vmatpush1.msra.mxu0 %v33
    %64 = vmatprep.subr.mxu0 0.0
    %65 = vmatpush1.msra.mxu0 %v34
    %66 = vmatprep.subr.mxu0 0.0
    %67 = vmatpush1.msra.mxu0 %v35
    %68 = vmatprep.subr.mxu0 0.0
    %69 = vmatpush1.msra.mxu0 %v36
    %70 = vmatprep.subr.mxu0 0.0
    %71 = vmatpush1.msra.mxu0 %v37
    %72 = vmatprep.subr.mxu0 0.0
    %73 = vmatpush1.msra.mxu0 %v38
    %74 = vmatprep.subr.mxu0 0.0
    %75 = vmatpush1.msra.mxu0 %v39
    %76 = vmatprep.subr.mxu0 0.0
    %77 = vmatpush1.msra.mxu0 %v40
    %78 = vmatprep.subr.mxu0 0.0
    %79 = vmatpush1.msra.mxu0 %v41
    %80 = vmatprep.subr.mxu0 0.0
    %81 = vmatpush1.msra.mxu0 %v42
    %82 = vmatprep.subr.mxu0 0.0
    %83 = vmatpush1.msra.mxu0 %v43
    %84 = vmatprep.subr.mxu0 0.0
    %85 = vmatpush1.msra.mxu0 %v44
    %86 = vmatprep.subr.mxu0 0.0
    %87 = vmatpush1.msra.mxu0 %v45
    %88 = vmatprep.subr.mxu0 0.0
    %89 = vmatpush1.msra.mxu0 0.0
    %90 = vmatprep.subr.mxu0 0.0
    %91 = vmatpush1.msra.mxu0 0.0
    %92 = vmatprep.subr.mxu0 0.0
    %93 = vmatpush1.msra.mxu0 0.0
    %94 = vmatprep.subr.mxu0 0.0
    %95 = vmatpush1.msra.mxu0 0.0
    %96 = vmatprep.subr.mxu0 0.0
    %97 = vmatpush1.msra.mxu0 0.0
    %98 = vmatprep.subr.mxu0 0.0
    %99 = vmatpush1.msra.mxu0 0.0
    %100 = vmatprep.subr.mxu0 0.0
    %101 = vmatpush1.msra.mxu0 0.0
    %102 = vmatprep.subr.mxu0 0.0
    %103 = vmatpush1.msra.mxu0 0.0
    %104 = vmatprep.subr.mxu0 0.0
    %105 = vmatpush1.msra.mxu0 0.0
    %106 = vmatprep.subr.mxu0 0.0
    %107 = vmatpush1.msra.mxu0 0.0
    %108 = vmatprep.subr.mxu0 0.0
    %109 = vmatpush1.msra.mxu0 0.0
    %110 = vmatprep.subr.mxu0 0.0
    %111 = vmatpush1.msra.mxu0 0.0
    %112 = vmatprep.subr.mxu0 0.0
    %113 = vmatpush1.msra.mxu0 0.0
    %114 = vmatprep.subr.mxu0 0.0
    %115 = vmatpush1.msra.mxu0 0.0
    %116 = vmatprep.subr.mxu0 0.0
    %117 = vmatpush1.msra.mxu0 0.0
    %118 = vmatprep.subr.mxu0 0.0
    %119 = vmatpush1.msra.mxu0 0.0
    %120 = vmatprep.mubr.f32.mxu0 0.0
    %121 = vmatmul.mubr.f32.gmra.mrb[0].mxu0 %v55
    %v122 = vpop.f32.mrb[0].mxu0
    %v123 = vadd.f32 0.0, %v122
    %v124 = vpop.f32.mrb[0].mxu0
    %125 = vdwg.mxu0
    %126 = vst [vmem:[#allocation5] sm:$0xff] %v123
    %v127 = vld [vmem:[%s2] sm:$0xff]
    %128 = vst [vmem:[#allocation5 + $0x8] sm:$0xff] %v127
    // Predicated region
    $region18: #{tpu_custom_call.1} parent=1 // pred_check
      _
    $region19: #{tpu_custom_call.1} parent=1 // pred_check_branch
      %130 = sbr.rel (0) target = $region21
    $region20: #{tpu_custom_call.1} parent=1 // pred_region
      %s132 = ssub.s32 256, 256
      %133 = vsyncadd [#allocation4], %s132
      %s135 = sshll.u32 [#allocation5], 4
      %s136 = int_to_ptr.vmem [resolvable:$true] %s135
      %138 = dma.vmem_to_hbm [thread:$0]  %s136, 256, %s3, [#allocation4]
    $region21: #{tpu_custom_call.1} parent=1 // pred_fallthru
      _
    // Predicated region
    $region22: #{tpu_custom_call.1} parent=1 // pred_check
      _
    $region23: #{tpu_custom_call.1} parent=1 // pred_check_branch
      %140 = sbr.rel (0) target = $region25
    $region24: #{tpu_custom_call.1} parent=1 // pred_region
      %141 = dma.done [#allocation4], 256
    $region25: #{tpu_custom_call.1} parent=1 // pred_fallthru
      _
    %142 = vsyncpa [#allocation3], 1
    %143 = vsyncpa [#allocation4], 1

// kernel: tpu_custom_call.1
$region0: #{tpu_custom_call.1}
  #allocation0 [shape = 'u32[]', space=smem, size = 0x4, offset = 0x4, fixed_abs, tag = 'smem constant byte address 0x4 - core index']
  #allocation1 [shape = 'u32[144,128]{1,0:T(1,128)}', space=vmem, size = 0x12000, scoped, tag = 'internal scratch']
  %s0 = inlined_call_operand.vmem [shape: s32[8,1], index: 0, kind: input, shape index: {}]
  %s1 = inlined_call_operand.hbm [shape: f32[128,128], index: 1, kind: input, shape index: {}]
  %s2 = inlined_call_operand.vmem [shape: f32[8,128], index: 2, kind: input, shape index: {}]
  %s3 = inlined_call_operand.hbm [shape: f32[8,256], index: 3, kind: output, shape index: {}]
  %s4 = sld [smem:[#allocation0]]
  $region26: #{tpu_custom_call.1} parent=0
    _
  %s6 = ssub.s32 1, %s4
  %s7 = scalar_select 0, %s6, %s4
  $region1: #{tpu_custom_call.1} parent=0
    #allocation2 [shape = 'u8[65536]{0}', space=vmem, size = 0x10000, scoped, tag = 'input window, operand 1, single buffered']
    #allocation3 [shape = 's32[1]{0}', space=sflag, size = 0x4, scoped, tag = 'scoped memory for tpu_custom_call.1']
    #allocation4 [shape = 's32[1]{0}', space=sflag, size = 0x4, scoped, tag = 'scoped memory for tpu_custom_call.1']
    #allocation5 [shape = 'u8[8192]{0}', space=vmem, size = 0x2000, scoped, tag = 'output window, operand 0, single buffered']
    %8 = vsyncpa [#allocation3], 0
    %9 = vsyncpa [#allocation4], 0
    // Predicated region
    $region2: #{tpu_custom_call.1} parent=1 // pred_check
      _
    $region3: #{tpu_custom_call.1} parent=1 // pred_check_branch
      %11 = sbr.rel (0) target = $region5
    $region4: #{tpu_custom_call.1} parent=1 // pred_region
      _
    $region5: #{tpu_custom_call.1} parent=1 // pred_fallthru
      _
    // Predicated region
    $region6: #{tpu_custom_call.1} parent=1 // pred_check
      _
    $region7: #{tpu_custom_call.1} parent=1 // pred_check_branch
      %13 = sbr.rel (0) target = $region9
    $region8: #{tpu_custom_call.1} parent=1 // pred_region
      %s15 = ssub.s32 2048, 2048
      %16 = vsyncadd [#allocation3], %s15
      %s17 = sshll.u32 [#allocation2], 4
      %s18 = int_to_ptr.vmem [resolvable:$true] %s17
      %23 = dma.hbm_to_vmem [thread:$0]  %s1, 2048, %s18, [#allocation3], 128, 128, 8
    $region9: #{tpu_custom_call.1} parent=1 // pred_fallthru
      _
    // Predicated region
    $region10: #{tpu_custom_call.1} parent=1 // pred_check
      _
    $region11: #{tpu_custom_call.1} parent=1 // pred_check_branch
      %25 = sbr.rel (0) target = $region13
    $region12: #{tpu_custom_call.1} parent=1 // pred_region
      _
    $region13: #{tpu_custom_call.1} parent=1 // pred_fallthru
      _
    // Predicated region
    $region14: #{tpu_custom_call.1} parent=1 // pred_check
      _
    $region15: #{tpu_custom_call.1} parent=1 // pred_check_branch
      %27 = sbr.rel (0) target = $region17
    $region16: #{tpu_custom_call.1} parent=1 // pred_region
      %28 = dma.done [#allocation3], 2048
    $region17: #{tpu_custom_call.1} parent=1 // pred_fallthru
      _
    %v29 = vld [vmem:[%s0] sm:$0xff]
    %v30 = vld [vmem:[#allocation2] sm:$0xff]
    %v31 = vld [vmem:[#allocation2 + $0x8] sm:$0xff]
    %v32 = vld [vmem:[#allocation2 + $0x10] sm:$0xff]
    %v33 = vld [vmem:[#allocation2 + $0x18] sm:$0xff]
    %v34 = vld [vmem:[#allocation2 + $0x20] sm:$0xff]
    %v35 = vld [vmem:[#allocation2 + $0x28] sm:$0xff]
    %v36 = vld [vmem:[#allocation2 + $0x30] sm:$0xff]
    %v37 = vld [vmem:[#allocation2 + $0x38] sm:$0xff]
    %v38 = vld [vmem:[#allocation2 + $0x40] sm:$0xff]
    %v39 = vld [vmem:[#allocation2 + $0x48] sm:$0xff]
    %v40 = vld [vmem:[#allocation2 + $0x50] sm:$0xff]
    %v41 = vld [vmem:[#allocation2 + $0x58] sm:$0xff]
    %v42 = vld [vmem:[#allocation2 + $0x60] sm:$0xff]
    %v43 = vld [vmem:[#allocation2 + $0x68] sm:$0xff]
    %v44 = vld [vmem:[#allocation2 + $0x70] sm:$0xff]
    %v45 = vld [vmem:[#allocation2 + $0x78] sm:$0xff]
    %v46 = vlaneseq
    %v47 = vand.u32 %v46, 127
    %v48 = vstv 0
    %v49 = vadd.s32 %v47, %v48
    %50 = vset.pattern.permute.xlu0 0
    %51 = vperm.xlu0 %50, %v29
    %v52 = vpop.permute.xlu0 %51
    %vm53 = vcmp.eq.s32.totalorder %v52, %v49
    %v54 = vsel %vm53, 1, 0
    %v55 = vcvt.s32.f32 %v54
    %56 = vmatprep.subr.mxu0 0.0
    %57 = vmatpush1.msra.mxu0 %v30
    %58 = vmatprep.subr.mxu0 0.0
    %59 = vmatpush1.msra.mxu0 %v31
    %60 = vmatprep.subr.mxu0 0.0
    %61 = vmatpush1.msra.mxu0 %v32
    %62 = vmatprep.subr.mxu0 0.0
    %63 = vmatpush1.msra.mxu0 %v33
    %64 = vmatprep.subr.mxu0 0.0
    %65 = vmatpush1.msra.mxu0 %v34
    %66 = vmatprep.subr.mxu0 0.0
    %67 = vmatpush1.msra.mxu0 %v35
    %68 = vmatprep.subr.mxu0 0.0
    %69 = vmatpush1.msra.mxu0 %v36
    %70 = vmatprep.subr.mxu0 0.0
    %71 = vmatpush1.msra.mxu0 %v37
    %72 = vmatprep.subr.mxu0 0.0
    %73 = vmatpush1.msra.mxu0 %v38
    %74 = vmatprep.subr.mxu0 0.0
    %75 = vmatpush1.msra.mxu0 %v39
    %76 = vmatprep.subr.mxu0 0.0
    %77 = vmatpush1.msra.mxu0 %v40
    %78 = vmatprep.subr.mxu0 0.0
    %79 = vmatpush1.msra.mxu0 %v41
    %80 = vmatprep.subr.mxu0 0.0
    %81 = vmatpush1.msra.mxu0 %v42
    %82 = vmatprep.subr.mxu0 0.0
    %83 = vmatpush1.msra.mxu0 %v43
    %84 = vmatprep.subr.mxu0 0.0
    %85 = vmatpush1.msra.mxu0 %v44
    %86 = vmatprep.subr.mxu0 0.0
    %87 = vmatpush1.msra.mxu0 %v45
    %88 = vmatprep.subr.mxu0 0.0
    %89 = vmatpush1.msra.mxu0 0.0
    %90 = vmatprep.subr.mxu0 0.0
    %91 = vmatpush1.msra.mxu0 0.0
    %92 = vmatprep.subr.mxu0 0.0
    %93 = vmatpush1.msra.mxu0 0.0
    %94 = vmatprep.subr.mxu0 0.0
    %95 = vmatpush1.msra.mxu0 0.0
    %96 = vmatprep.subr.mxu0 0.0
    %97 = vmatpush1.msra.mxu0 0.0
    %98 = vmatprep.subr.mxu0 0.0
    %99 = vmatpush1.msra.mxu0 0.0
    %100 = vmatprep.subr.mxu0 0.0
    %101 = vmatpush1.msra.mxu0 0.0
    %102 = vmatprep.subr.mxu0 0.0
    %103 = vmatpush1.msra.mxu0 0.0
    %104 = vmatprep.subr.mxu0 0.0
    %105 = vmatpush1.msra.mxu0 0.0
    %106 = vmatprep.subr.mxu0 0.0
    %107 = vmatpush1.msra.mxu0 0.0
    %108 = vmatprep.subr.mxu0 0.0
    %109 = vmatpush1.msra.mxu0 0.0
    %110 = vmatprep.subr.mxu0 0.0
    %111 = vmatpush1.msra.mxu0 0.0
    %112 = vmatprep.subr.mxu0 0.0
    %113 = vmatpush1.msra.mxu0 0.0
    %114 = vmatprep.subr.mxu0 0.0
    %115 = vmatpush1.msra.mxu0 0.0
    %116 = vmatprep.subr.mxu0 0.0
    %117 = vmatpush1.msra.mxu0 0.0
    %118 = vmatprep.subr.mxu0 0.0
    %119 = vmatpush1.msra.mxu0 0.0
    %120 = vmatprep.mubr.f32.mxu0 0.0
    %121 = vmatmul.mubr.f32.gmra.mrb[0].mxu0 %v55
    %v122 = vpop.f32.mrb[0].mxu0
    %v123 = vadd.f32 0.0, %v122
    %v124 = vpop.f32.mrb[0].mxu0
    %125 = vdwg.mxu0
    %126 = vst [vmem:[#allocation5] sm:$0xff] %v123
    %v127 = vld [vmem:[%s2] sm:$0xff]
    %128 = vst [vmem:[#allocation5 + $0x8] sm:$0xff] %v127
    // Predicated region
    $region18: #{tpu_custom_call.1} parent=1 // pred_check
      _
    $region19: #{tpu_custom_call.1} parent=1 // pred_check_branch
      %130 = sbr.rel (0) target = $region21
    $region20: #{tpu_custom_call.1} parent=1 // pred_region
      %s132 = ssub.s32 256, 256
      %133 = vsyncadd [#allocation4], %s132
      %s135 = sshll.u32 [#allocation5], 4
      %s136 = int_to_ptr.vmem [resolvable:$true] %s135
      %138 = dma.vmem_to_hbm [thread:$0]  %s136, 256, %s3, [#allocation4]
    $region21: #{tpu_custom_call.1} parent=1 // pred_fallthru
      _
    // Predicated region
    $region22: #{tpu_custom_call.1} parent=1 // pred_check
      _
    $region23: #{tpu_custom_call.1} parent=1 // pred_check_branch
      %140 = sbr.rel (0) target = $region25
    $region24: #{tpu_custom_call.1} parent=1 // pred_region
      %141 = dma.done [#allocation4], 256
    $region25: #{tpu_custom_call.1} parent=1 // pred_fallthru
      _
    %142 = vsyncpa [#allocation3], 1
    %143 = vsyncpa [#allocation4], 1

</llo_original>
